<compile_context>
chip_gen: v7x
topology: tpu7x:2x2x1
jax: 0.10.0
libtpu: 0.0.40
codegen_flags: <defaults>
</compile_context>

<pallas_src>
import numpy as np
import jax
import jax.numpy as jnp
from jax.experimental import pallas as pl
from jax.experimental.pallas import tpu as pltpu


def _pick_tile(total, cap, align):
    """Largest multiple of `align` <= cap that divides `total` (fallback: total)."""
    t = (min(cap, total) // align) * align
    while t >= align:
        if total % t == 0:
            return t
        t -= align
    return total


def _pick_group(n, cap=8):
    """Largest divisor of n that is <= cap (image-chunk size for the resamplers)."""
    g = max(1, min(n, cap))
    while n % g:
        g -= 1
    return g


# ---------------------------------------------------------------------------
# Kernel 1: resampler   out_chunk = blockdiag(A) @ x_chunk @ W   (one chunk of g images)
# ---------------------------------------------------------------------------
def _resampler_kernel(x_ref, w_ref, a_ref, o_ref):
    # a_ref: (g*t_out, g*t_in) bf16 block-diagonal; x_ref: (g*t_in, d_in) bf16
    tmp = jnp.dot(a_ref[...], x_ref[...],
                  preferred_element_type=jnp.float32)            # (g*t_out, d_in)
    o_ref[...] = jnp.dot(tmp.astype(jnp.bfloat16), w_ref[...],
                         preferred_element_type=jnp.float32).astype(o_ref.dtype)


def resampler(x, w, a, group_cap=8):
    # x: (n, t_in, d_in) bf16 ; w: (d_in, d_out) bf16 ; a: (t_out, t_in) bf16
    n, t_in, d_in = x.shape
    t_out = a.shape[0]
    d_out = w.shape[1]
    g = _pick_group(n, group_cap)
    n_chunks = n // g
    # Fuse g images into one pair of MXU matmuls via a block-diagonal A (tiny, built once).
    a_bd = jnp.kron(jnp.eye(g, dtype=a.dtype), a)                # (g*t_out, g*t_in)
    x_flat = x.reshape(n * t_in, d_in)
    out = pl.pallas_call(
        _resampler_kernel,
        out_shape=jax.ShapeDtypeStruct((n * t_out, d_out), jnp.float32),
        grid=(n_chunks,),
        in_specs=[
            pl.BlockSpec((g * t_in, d_in), lambda i: (i, 0)),
            pl.BlockSpec((d_in, d_out), lambda i: (0, 0)),
            pl.BlockSpec((g * t_out, g * t_in), lambda i: (0, 0)),
        ],
        out_specs=pl.BlockSpec((g * t_out, d_out), lambda i: (i, 0)),
        compiler_params=pltpu.CompilerParams(dimension_semantics=("parallel",)),
    )(x_flat, w, a_bd)
    return out.reshape(n, t_out, d_out)


# ---------------------------------------------------------------------------
# Kernel 1b: output resampler fused with cosine reconstruction loss (per image chunk)
# ---------------------------------------------------------------------------
def _resampler_cosine_kernel(x_ref, w_ref, a_ref, tgt_ref, loss_ref):
    tmp = jnp.dot(a_ref[...], x_ref[...],
                  preferred_element_type=jnp.float32)            # (g*P, Q*g? -> d_in)
    rec = jnp.dot(tmp.astype(jnp.bfloat16), w_ref[...],
                  preferred_element_type=jnp.float32)            # (g*P, C) f32
    tgt = tgt_ref[...].astype(jnp.float32)
    rec_n = rec * jax.lax.rsqrt(jnp.sum(rec * rec, axis=-1, keepdims=True) + 1e-12)
    tgt_n = tgt * jax.lax.rsqrt(jnp.sum(tgt * tgt, axis=-1, keepdims=True) + 1e-12)
    loss_ref[0, 0] = jnp.sum(1.0 - jnp.sum(rec_n * tgt_n, axis=-1))


def resampler_cosine_loss(x, w, a, tgt, group_cap=8):
    # x: (n, Q, dim) bf16 ; w: (dim, C) bf16 ; a: (P, Q) bf16 ; tgt: (n, P, C) f32
    n, t_in, d_in = x.shape
    t_out, d_out = tgt.shape[1], tgt.shape[2]
    g = _pick_group(n, group_cap)
    n_chunks = n // g
    a_bd = jnp.kron(jnp.eye(g, dtype=a.dtype), a)                # (g*P, g*Q)
    x_flat = x.reshape(n * t_in, d_in)
    tgt_flat = tgt.reshape(n * t_out, d_out)
    partials = pl.pallas_call(
        _resampler_cosine_kernel,
        out_shape=jax.ShapeDtypeStruct((n_chunks, 1), jnp.float32),
        grid=(n_chunks,),
        in_specs=[
            pl.BlockSpec((g * t_in, d_in), lambda i: (i, 0)),
            pl.BlockSpec((d_in, d_out), lambda i: (0, 0)),
            pl.BlockSpec((g * t_out, g * t_in), lambda i: (0, 0)),
            pl.BlockSpec((g * t_out, d_out), lambda i: (i, 0)),
        ],
        out_specs=pl.BlockSpec((1, 1), lambda i: (i, 0),
                               memory_space=pltpu.MemorySpace.SMEM),
        compiler_params=pltpu.CompilerParams(dimension_semantics=("parallel",)),
    )(x_flat, w, a_bd, tgt_flat)
    return jnp.sum(partials) / jnp.float32(n * t_out)


# ---------------------------------------------------------------------------
# Kernel 2: synthetic LLM (residual MLP + LM head + masked shifted CE)
#           grid = (row_tiles [parallel], vocab_tiles [arbitrary])
# ---------------------------------------------------------------------------
def _llm_kernel(x_ref, lab_ref, w1_ref, b1_ref, w2_ref, wh_ref,
                hid_ref, loss_ref, cnt_ref,
                m_acc, l_acc, lab_logit_acc):
    j = pl.program_id(1)
    n_vocab_tiles = pl.num_programs(1)
    tile_v = wh_ref.shape[1]

    # --- per-row-tile prologue: residual MLP, bf16 hidden written ONCE, scratch init ---
    @pl.when(j == 0)
    def _():
        x = x_ref[...]                                                    # (TM, D) f32
        xb = x.astype(jnp.bfloat16)
        h1 = jnp.dot(xb, w1_ref[...], preferred_element_type=jnp.float32) + b1_ref[...]
        h1 = jax.nn.gelu(h1, approximate=True)
        h2 = jnp.dot(h1.astype(jnp.bfloat16), w2_ref[...],
                     preferred_element_type=jnp.float32) + x              # residual
        # hid_ref (bf16 output block, resident across all vocab tiles) doubles as the
        # LM-head LHS -> no per-vocab-tile f32->bf16 recast, no extra f32 scratch.
        hid_ref[...] = h2.astype(hid_ref.dtype)
        m_acc[...] = jnp.full_like(m_acc, -jnp.inf)
        l_acc[...] = jnp.zeros_like(l_acc)
        lab_logit_acc[...] = jnp.zeros_like(lab_logit_acc)

    # --- LM-head vocab tile: online logsumexp + label-logit accumulation ---
    logits = jnp.dot(hid_ref[...], wh_ref[...],
                     preferred_element_type=jnp.float32)                  # (TM, TV)
    labels = lab_ref[...]                                                 # (TM, 1) int32
    col = jax.lax.broadcasted_iota(jnp.int32, logits.shape, 1) + j * tile_v
    lab_logit_acc[...] += jnp.sum(jnp.where(col == labels, logits, 0.0),
                                  axis=-1, keepdims=True)

    m_prev = m_acc[...]
    m_new = jnp.maximum(m_prev, jnp.max(logits, axis=-1, keepdims=True))
    l_acc[...] = (l_acc[...] * jnp.exp(m_prev - m_new)
                  + jnp.sum(jnp.exp(logits - m_new), axis=-1, keepdims=True))
    m_acc[...] = m_new

    # --- epilogue: masked token-level CE partial sums (mean taken outside) ---
    @pl.when(j == n_vocab_tiles - 1)
    def _():
        lse = m_acc[...] + jnp.log(l_acc[...])                            # (TM, 1)
        valid = (lab_ref[...] >= 0).astype(jnp.float32)
        loss_ref[0, 0] = jnp.sum(valid * (lse - lab_logit_acc[...]))
        cnt_ref[0, 0] = jnp.sum(valid)


def llm_forward(inputs_embeds, shifted_labels, w1, b1, w2, wh,
                tile_m_cap=512, tile_v_cap=2048):
    bz, sq, dim = inputs_embeds.shape
    rows = bz * sq
    hmlp = w1.shape[1]
    vocab = wh.shape[1]
    tm = _pick_tile(rows, tile_m_cap, 16)      # 16: bf16 sublane packing for hid/MXU LHS
    tv = _pick_tile(vocab, tile_v_cap, 256)    # fill the 256-wide MXU N dim (v6e/v7x)
    nmt, nvt = rows // tm, vocab // tv

    x = inputs_embeds.reshape(rows, dim)
    lab = shifted_labels.reshape(rows, 1).astype(jnp.int32)

    # Explicit VMEM budget: double-buffered inputs/outputs + scratch + logits headroom.
    # Capped at 48 MiB so the same config fits v7x's 64 MiB physical VMEM.
    vmem_est = (2 * tm * dim * 4                # x tile f32, double-buffered
                + 2 * dim * tv * 2              # wh tile bf16, double-buffered
                + 2 * tm * dim * 2              # hid output bf16, double-buffered
                + 2 * (dim * hmlp * 2 + hmlp * 4 + hmlp * dim * 2)   # w1/b1/w2
                + 2 * tm * 4                    # labels
                + 3 * tm * 4                    # accumulator scratch
                + 2 * tm * tv * 4)              # logits temporaries headroom
    vmem_limit = int(min(max(2 * vmem_est, 16 << 20), 48 << 20))

    hid, loss_p, cnt_p = pl.pallas_call(
        _llm_kernel,
        out_shape=(
            jax.ShapeDtypeStruct((rows, dim), jnp.bfloat16),     # bf16 hidden writeback
            jax.ShapeDtypeStruct((nmt, 1), jnp.float32),
            jax.ShapeDtypeStruct((nmt, 1), jnp.float32),
        ),
        grid=(nmt, nvt),
        in_specs=[
            pl.BlockSpec((tm, dim), lambda i, j: (i, 0)),
            pl.BlockSpec((tm, 1), lambda i, j: (i, 0)),
            pl.BlockSpec((dim, hmlp), lambda i, j: (0, 0)),
            pl.BlockSpec((1, hmlp), lambda i, j: (0, 0)),
            pl.BlockSpec((hmlp, dim), lambda i, j: (0, 0)),
            pl.BlockSpec((dim, tv), lambda i, j: (0, j)),
        ],
        out_specs=(
            pl.BlockSpec((tm, dim), lambda i, j: (i, 0)),
            pl.BlockSpec((1, 1), lambda i, j: (i, 0),
                         memory_space=pltpu.MemorySpace.SMEM),
            pl.BlockSpec((1, 1), lambda i, j: (i, 0),
                         memory_space=pltpu.MemorySpace.SMEM),
        ),
        scratch_shapes=[
            pltpu.VMEM((tm, 1), jnp.float32),   # m_acc
            pltpu.VMEM((tm, 1), jnp.float32),   # l_acc
            pltpu.VMEM((tm, 1), jnp.float32),   # lab_logit_acc
        ],
        compiler_params=pltpu.CompilerParams(
            dimension_semantics=("parallel", "arbitrary"),
            vmem_limit_bytes=vmem_limit),
    )(x, lab, w1, b1, w2, wh)

    return hid.reshape(bz, sq, dim), jnp.sum(loss_p), jnp.sum(cnt_p)


# ---------------------------------------------------------------------------
# ContinuousLVLM forward (glue in plain JAX / numpy for data-dependent masking)
# ---------------------------------------------------------------------------
class ContinuousLVLMPallas:
    def __init__(self, params, lm_loss_scale=1.0, rec_loss_scale=1.0,
                 llm_tile_m=512, llm_tile_v=2048):
        self.p = dict(params)
        self.lm_loss_scale = lm_loss_scale
        self.rec_loss_scale = rec_loss_scale
        self.llm_tile_m = llm_tile_m
        self.llm_tile_v = llm_tile_v
        self.num_queries = params["a_in"].shape[0]
        self.embed_dim = params["w_in"].shape[1]
        # Pre-cast MXU operands to bf16 once: halves weight DMA bytes, ~2x MXU throughput
        # on v6e/v7x; f32 accumulation keeps numerics safe.
        for k in ("w_in", "a_in", "w_out", "a_out", "w1", "w2", "wh"):
            self.p[k + "_bf16"] = params[k].astype(jnp.bfloat16)
        # add_patch_pos=False, vit_down=False, mse=False (module defaults)

    def forward(self, input_ids, attention_mask, labels, image_embeds,
                embeds_gen_mask, embeds_cmp_mask, ids_gen_mask, ids_cmp_mask):
        del attention_mask  # TODO(synk): synthetic llm has no attention layer
        p = self.p
        dim = self.embed_dim
        bz, sq = input_ids.shape  # shape only; no host transfer of token data

        # token embedding lookup
        input_embeds = jnp.take(p["embed_table"], jnp.asarray(input_ids), axis=0)

        # Masks are treated as host-side metadata (already numpy in practice): nonzero()
        # below does not force a device sync.
        embeds_cmp_np = np.asarray(embeds_cmp_mask)
        embeds_gen_np = np.asarray(embeds_gen_mask)
        has_image_input = image_embeds is not None and bool(embeds_cmp_np.sum() > 0)
        has_image_output = image_embeds is not None and bool(embeds_gen_np.sum() > 0)

        # TODO(synk): host-side nonzero glue for data-dependent image-token slots; a
        # production version would use static max-image counts + scalar-prefetch index
        # maps (PrefetchScalarGridSpec) to keep the whole chain device-side/async.
        if has_image_input:
            cmp_idx = np.nonzero(embeds_cmp_np)[0]
            image_embeds_cmp = jnp.asarray(image_embeds)[cmp_idx]            # (n_cmp, P, C)
            image_embeds_lm = resampler(image_embeds_cmp.astype(jnp.bfloat16),
                                        p["w_in_bf16"], p["a_in_bf16"])       # (n_cmp, Q, dim)
            rows, cols = np.nonzero(np.asarray(ids_cmp_mask))
            input_embeds = input_embeds.at[rows, cols, :].set(
                image_embeds_lm.reshape(-1, dim))

        # HF causal shift: label[t] <- labels[t+1], last position ignored (-100)
        labels_j = jnp.asarray(labels)
        shifted = jnp.concatenate(
            [labels_j[:, 1:], jnp.full((bz, 1), -100, dtype=labels_j.dtype)], axis=1)

        last_hidden, loss_sum, cnt = llm_forward(
            input_embeds, shifted, p["w1_bf16"], p["b1"], p["w2_bf16"], p["wh_bf16"],
            tile_m_cap=self.llm_tile_m, tile_v_cap=self.llm_tile_v)
        # matches HF: nan if every shifted label is ignore_index
        lm_loss = loss_sum / cnt

        if has_image_output:
            gen_idx = np.nonzero(embeds_gen_np)[0]
            target_embeds = jnp.asarray(image_embeds)[gen_idx]               # (n_gen, P, C)
            num_imgs_for_rec = int(target_embeds.shape[0])
            ids_gen_np = np.asarray(ids_gen_mask)
            out_gen_mask = np.zeros_like(ids_gen_np)
            out_gen_mask[:, :-1] = ids_gen_np[:, 1:]                         # shift-left, last col False
            g_rows, g_cols = np.nonzero(out_gen_mask)
            output_image_embeds = last_hidden[g_rows, g_cols, :].reshape(
                num_imgs_for_rec, -1, dim)                                   # (n_gen, Q, dim) bf16
            # output resampler + cosine loss fused in one kernel (no HBM round trip)
            rec_loss = resampler_cosine_loss(
                output_image_embeds.astype(jnp.bfloat16),
                p["w_out_bf16"], p["a_out_bf16"],
                jax.lax.stop_gradient(target_embeds.astype(jnp.float32)))
        else:
            rand = jax.random.normal(jax.random.PRNGKey(1),
                                     (1, self.num_queries, self.embed_dim), jnp.float32)
            dummy = rand + 0.0 * last_hidden[0:1, :self.num_queries, :].astype(jnp.float32)
            recon = resampler(dummy.astype(jnp.bfloat16),
                              p["w_out_bf16"], p["a_out_bf16"])
            rec_loss = 0.0 * jnp.sum(recon)

        total_loss = self.lm_loss_scale * lm_loss + self.rec_loss_scale * rec_loss
        return {"total_loss": total_loss, "lm_loss": lm_loss, "rec_loss": rec_loss}


# ---------------------------------------------------------------------------
if __name__ == "__main__":
    VOCAB, DIM, HMLP = 512, 128, 256
    BZ, SQ = 2, 128
    N_IMG, P, C_VIT, Q = 2, 16, 128, 8

    key = jax.random.PRNGKey(0)
    keys = jax.random.split(key, 12)
    params = {
        "embed_table": jax.random.normal(keys[0], (VOCAB, DIM)) * 0.02,
        "w1": jax.random.normal(keys[1], (DIM, HMLP)) * (DIM ** -0.5),
        "b1": jnp.zeros((1, HMLP), jnp.float32),
        "w2": jax.random.normal(keys[2], (HMLP, DIM)) * (HMLP ** -0.5),
        "wh": jax.random.normal(keys[3], (DIM, VOCAB)) * (DIM ** -0.5),
        "w_in": jax.random.normal(keys[4], (C_VIT, DIM)) * (C_VIT ** -0.5),
        "a_in": jax.random.normal(keys[5], (Q, P)) * (P ** -0.5),
        "w_out": jax.random.normal(keys[6], (DIM, C_VIT)) * (DIM ** -0.5),
        "a_out": jax.random.normal(keys[7], (P, Q)) * (Q ** -0.5),
    }
    params = {k: v.astype(jnp.float32) for k, v in params.items()}

    input_ids = jax.random.randint(keys[8], (BZ, SQ), 0, VOCAB)
    attention_mask = np.ones((BZ, SQ), np.int32)
    labels = jax.random.randint(keys[9], (BZ, SQ), 0, VOCAB)
    labels = labels.at[:, :4].set(-100)          # some ignored positions
    image_embeds = jax.random.normal(keys[10], (N_IMG, P, C_VIT), dtype=jnp.float32)

    embeds_cmp_mask = np.array([True, False])
    embeds_gen_mask = np.array([False, True])
    ids_cmp_mask = np.zeros((BZ, SQ), dtype=bool)
    ids_cmp_mask[0, 4:4 + Q] = True        # 1 comprehension image -> Q token slots
    ids_gen_mask = np.zeros((BZ, SQ), dtype=bool)
    ids_gen_mask[1, 10:10 + Q] = True      # 1 generation image -> Q token slots

    # llm_tile_v=256 so the toy vocab (512) exercises the multi-vocab-tile online-lse path;
    # production configs use the larger defaults (tm 512 / tv 2048) to fill the MXU.
    model = ContinuousLVLMPallas(params, lm_loss_scale=1.0, rec_loss_scale=1.0,
                                 llm_tile_m=256, llm_tile_v=256)
    out = model.forward(input_ids, attention_mask, labels, image_embeds,
                        embeds_gen_mask, embeds_cmp_mask, ids_gen_mask, ids_cmp_mask)
    jax.block_until_ready(out["total_loss"])
    assert np.isfinite(float(out["total_loss"]))
    print("KERNEL_OK")
</pallas_src>

<mosaic_0001>
module attributes {stable_mosaic.version = 11 : i64} {
  func.func @_resampler_kernel(%arg0: i32, %arg1: memref<16x128xbf16, #tpu.memory_space<vmem>>, %arg2: memref<128x128xbf16, #tpu.memory_space<vmem>>, %arg3: memref<8x16xbf16, #tpu.memory_space<vmem>>, %arg4: memref<8x128xf32, #tpu.memory_space<vmem>>) attributes {dimension_semantics = [#tpu.dimension_semantics<parallel>], iteration_bounds = array<i64: 1>, scalar_prefetch = 0 : i64, scratch_operands = 0 : i64, tpu.core_type = #tpu.core_type<tc>, window_params = [{transform_indices = @transform_0, window_bounds = array<i64: 16, 128>}, {pipeline_mode = #tpu.pipeline_mode<synchronous>, transform_indices = @transform_1, window_bounds = array<i64: 128, 128>}, {pipeline_mode = #tpu.pipeline_mode<synchronous>, transform_indices = @transform_2, window_bounds = array<i64: 8, 16>}, {transform_indices = @transform_3, window_bounds = array<i64: 8, 128>}]} {
    %c0 = arith.constant 0 : index
    %c0_0 = arith.constant 0 : index
    %0 = vector.load %arg3[%c0, %c0_0] : memref<8x16xbf16, #tpu.memory_space<vmem>>, vector<8x16xbf16>
    %c0_1 = arith.constant 0 : index
    %c0_2 = arith.constant 0 : index
    %1 = vector.load %arg1[%c0_1, %c0_2] : memref<16x128xbf16, #tpu.memory_space<vmem>>, vector<16x128xbf16>
    %cst = arith.constant dense<0.000000e+00> : vector<8x128xf32>
    %2 = tpu.matmul %0, %1, %cst {dimension_numbers = #tpu.dot_dimension_numbers<[1], [0], [0], [1], [0, 0, 1, 1], [], []>} : vector<8x16xbf16>, vector<16x128xbf16>, vector<8x128xf32> -> vector<8x128xf32>
    %3 = arith.truncf %2 : vector<8x128xf32> to vector<8x128xbf16>
    %c0_3 = arith.constant 0 : index
    %c0_4 = arith.constant 0 : index
    %4 = vector.load %arg2[%c0_3, %c0_4] : memref<128x128xbf16, #tpu.memory_space<vmem>>, vector<128x128xbf16>
    %cst_5 = arith.constant dense<0.000000e+00> : vector<8x128xf32>
    %5 = tpu.matmul %3, %4, %cst_5 {dimension_numbers = #tpu.dot_dimension_numbers<[1], [0], [0], [1], [0, 0, 1, 1], [], []>} : vector<8x128xbf16>, vector<128x128xbf16>, vector<8x128xf32> -> vector<8x128xf32>
    %c0_6 = arith.constant 0 : index
    %c0_7 = arith.constant 0 : index
    %6 = vector.load %arg4[%c0_6, %c0_7] : memref<8x128xf32, #tpu.memory_space<vmem>>, vector<8x128xf32>
    tpu.vector_store %arg4[%c0_6, %c0_7], %5 {strides = array<i32>} : memref<8x128xf32, #tpu.memory_space<vmem>>, vector<8x128xf32>,
    return
  }
  func.func @transform_0(%arg0: i32) -> (i32, i32) {
    %c0_i32 = arith.constant 0 : i32
    %c0_i32_0 = arith.constant 0 : i32
    return %arg0, %c0_i32 : i32, i32
  }
  func.func @transform_1(%arg0: i32) -> (i32, i32) {
    %c0_i32 = arith.constant 0 : i32
    %c0_i32_0 = arith.constant 0 : i32
    %c0_i32_1 = arith.constant 0 : i32
    return %c0_i32, %c0_i32_0 : i32, i32
  }
  func.func @transform_2(%arg0: i32) -> (i32, i32) {
    %c0_i32 = arith.constant 0 : i32
    %c0_i32_0 = arith.constant 0 : i32
    %c0_i32_1 = arith.constant 0 : i32
    return %c0_i32, %c0_i32_0 : i32, i32
  }
  func.func @transform_3(%arg0: i32) -> (i32, i32) {
    %c0_i32 = arith.constant 0 : i32
    %c0_i32_0 = arith.constant 0 : i32
    return %arg0, %c0_i32 : i32, i32
  }
}

</mosaic_0001>

<llo_original>
// kernel: tpu_custom_call.1
$region0: #{tpu_custom_call.1}
  #allocation0 [shape = 'u32[]', space=smem, size = 0x4, offset = 0x4, fixed_abs, tag = 'smem constant byte address 0x4 - core index']
  #allocation1 [shape = 'u32[144,128]{1,0:T(1,128)}', space=vmem, size = 0x12000, scoped, tag = 'internal scratch']
  %s0 = inlined_call_operand.hbm [shape: bf16[16,128], index: 0, kind: input, shape index: {}]
  %s1 = inlined_call_operand.hbm [shape: bf16[128,128], index: 1, kind: input, shape index: {}]
  %s2 = inlined_call_operand.vmem [shape: bf16[8,16], index: 2, kind: input, shape index: {}]
  %s3 = inlined_call_operand.hbm [shape: f32[8,128], index: 3, kind: output, shape index: {}]
  %s4 = sld [smem:[#allocation0]]
  $region30: #{tpu_custom_call.1} parent=0
    _
  %s6 = ssub.s32 1, %s4
  %s7 = scalar_select 0, %s6, %s4
  $region1: #{tpu_custom_call.1} parent=0
    #allocation2 [shape = 'u8[4096]{0}', space=vmem, size = 0x1000, scoped, tag = 'input window, operand 0, single buffered']
    #allocation3 [shape = 's32[1]{0}', space=sflag, size = 0x4, scoped, tag = 'scoped memory for tpu_custom_call.1']
    #allocation4 [shape = 's32[1]{0}', space=sflag, size = 0x4, scoped, tag = 'scoped memory for tpu_custom_call.1']
    #allocation5 [shape = 'u8[32768]{0}', space=vmem, size = 0x8000, scoped, tag = 'input window, operand 1, single buffered']
    #allocation6 [shape = 's32[1]{0}', space=sflag, size = 0x4, scoped, tag = 'scoped memory for tpu_custom_call.1']
    #allocation7 [shape = 'u8[4096]{0}', space=vmem, size = 0x1000, scoped, tag = 'output window, operand 0, single buffered']
    %8 = vsyncpa [#allocation3], 0
    %9 = vsyncpa [#allocation6], 0
    %10 = vsyncpa [#allocation4], 0
    // Predicated region
    $region2: #{tpu_custom_call.1} parent=1 // pred_check
      _
    $region3: #{tpu_custom_call.1} parent=1 // pred_check_branch
      %12 = sbr.rel (0) target = $region5
    $region4: #{tpu_custom_call.1} parent=1 // pred_region
      %s14 = ssub.s32 128, 128
      %15 = vsyncadd [#allocation3], %s14
      %s16 = sshll.u32 [#allocation2], 4
      %s17 = int_to_ptr.vmem [resolvable:$true] %s16
      %22 = dma.hbm_to_vmem [thread:$0]  %s0, 128, %s17, [#allocation3], 64, 64, 4
    $region5: #{tpu_custom_call.1} parent=1 // pred_fallthru
      _
    // Predicated region
    $region6: #{tpu_custom_call.1} parent=1 // pred_check
      _
    $region7: #{tpu_custom_call.1} parent=1 // pred_check_branch
      %24 = sbr.rel (0) target = $region9
    $region8: #{tpu_custom_call.1} parent=1 // pred_region
      %s26 = ssub.s32 1024, 1024
      %27 = vsyncadd [#allocation6], %s26
      %s28 = sshll.u32 [#allocation5], 4
      %s29 = int_to_ptr.vmem [resolvable:$true] %s28
      %34 = dma.hbm_to_vmem [thread:$0]  %s1, 1024, %s29, [#allocation6], 64, 64, 4
    $region9: #{tpu_custom_call.1} parent=1 // pred_fallthru
      _
    // Predicated region
    $region10: #{tpu_custom_call.1} parent=1 // pred_check
      _
    $region11: #{tpu_custom_call.1} parent=1 // pred_check_branch
      %36 = sbr.rel (0) target = $region13
    $region12: #{tpu_custom_call.1} parent=1 // pred_region
      _
    $region13: #{tpu_custom_call.1} parent=1 // pred_fallthru
      _
    // Predicated region
    $region14: #{tpu_custom_call.1} parent=1 // pred_check
      _
    $region15: #{tpu_custom_call.1} parent=1 // pred_check_branch
      %38 = sbr.rel (0) target = $region17
    $region16: #{tpu_custom_call.1} parent=1 // pred_region
      %39 = dma.done [#allocation3], 128
    $region17: #{tpu_custom_call.1} parent=1 // pred_fallthru
      _
    // Predicated region
    $region18: #{tpu_custom_call.1} parent=1 // pred_check
      _
    $region19: #{tpu_custom_call.1} parent=1 // pred_check_branch
      %41 = sbr.rel (0) target = $region21
    $region20: #{tpu_custom_call.1} parent=1 // pred_region
      %42 = dma.done [#allocation6], 1024
    $region21: #{tpu_custom_call.1} parent=1 // pred_fallthru
      _
    %v44 = vld [vmem:[%s2] sm:$0xf]
    %v45 = vld [vmem:[#allocation2] sm:$0xf]
    %v46 = vld [vmem:[#allocation2 + $0x4] sm:$0xf]
    %v49 = vunpack.c.l.b16 %v45
    %v50 = vunpack.c.l.b16 %v46
    %v51 = vpack.c.b16 %v50, %v49
    %vm53 = vcmask 130048
    %v55 = vsel %vm53, %v44, 0
    %57 = vmatprep.subr.bf16.mxu0 0
    %58 = vmatpush1.bf16.msra.mxu0 %v51
    %59 = vmatprep.subr.bf16.mxu0 0
    %60 = vmatpush1.bf16.msra.mxu0 0
    %61 = vmatprep.subr.bf16.mxu0 0
    %62 = vmatpush1.bf16.msra.mxu0 0
    %63 = vmatprep.subr.bf16.mxu0 0
    %64 = vmatpush1.bf16.msra.mxu0 0
    %65 = vmatprep.subr.bf16.mxu0 0
    %66 = vmatpush1.bf16.msra.mxu0 0
    %67 = vmatprep.subr.bf16.mxu0 0
    %68 = vmatpush1.bf16.msra.mxu0 0
    %69 = vmatprep.subr.bf16.mxu0 0
    %70 = vmatpush1.bf16.msra.mxu0 0
    %71 = vmatprep.subr.bf16.mxu0 0
    %72 = vmatpush1.bf16.msra.mxu0 0
    %73 = vmatprep.subr.bf16.mxu0 0
    %74 = vmatpush1.bf16.msra.mxu0 0
    %75 = vmatprep.subr.bf16.mxu0 0
    %76 = vmatpush1.bf16.msra.mxu0 0
    %77 = vmatprep.subr.bf16.mxu0 0
    %78 = vmatpush1.bf16.msra.mxu0 0
    %79 = vmatprep.subr.bf16.mxu0 0
    %80 = vmatpush1.bf16.msra.mxu0 0
    %81 = vmatprep.subr.bf16.mxu0 0
    %82 = vmatpush1.bf16.msra.mxu0 0
    %83 = vmatprep.subr.bf16.mxu0 0
    %84 = vmatpush1.bf16.msra.mxu0 0
    %85 = vmatprep.subr.bf16.mxu0 0
    %86 = vmatpush1.bf16.msra.mxu0 0
    %87 = vmatprep.subr.bf16.mxu0 0
    %88 = vmatpush1.bf16.msra.mxu0 0
    %89 = vmatprep.mubr.bf16.mxu0 0
    %90 = vmatmul.mubr.bf16.gmra.mrb[0].mxu0 %v55
    %v91 = vpop.f32.mrb[0].mxu0
    %v92 = vadd.f32 0.0, %v91
    %v93 = vpop.f32.mrb[0].mxu0
    %v94 = vpop.f32.mrb[0].mxu0
    %v95 = vpop.f32.mrb[0].mxu0
    %96 = vdwg.mxu0
    %v97 = vpack.c.bf16 %v92, %v92
    %v98 = vld [vmem:[#allocation5] sm:$0xf]
    %v99 = vld [vmem:[#allocation5 + $0x4] sm:$0xf]
    %v100 = vld [vmem:[#allocation5 + $0x8] sm:$0xf]
    %v101 = vld [vmem:[#allocation5 + $0xc] sm:$0xf]
    %v102 = vld [vmem:[#allocation5 + $0x10] sm:$0xf]
    %v103 = vld [vmem:[#allocation5 + $0x14] sm:$0xf]
    %v104 = vld [vmem:[#allocation5 + $0x18] sm:$0xf]
    %v105 = vld [vmem:[#allocation5 + $0x1c] sm:$0xf]
    %v106 = vld [vmem:[#allocation5 + $0x20] sm:$0xf]
    %v107 = vld [vmem:[#allocation5 + $0x24] sm:$0xf]
    %v108 = vld [vmem:[#allocation5 + $0x28] sm:$0xf]
    %v109 = vld [vmem:[#allocation5 + $0x2c] sm:$0xf]
    %v110 = vld [vmem:[#allocation5 + $0x30] sm:$0xf]
    %v111 = vld [vmem:[#allocation5 + $0x34] sm:$0xf]
    %v112 = vld [vmem:[#allocation5 + $0x38] sm:$0xf]
    %v113 = vld [vmem:[#allocation5 + $0x3c] sm:$0xf]
    %v130 = vunpack.c.l.b16 %v98
    %v131 = vunpack.c.l.b16 %v99
    %v132 = vunpack.c.l.b16 %v100
    %v133 = vunpack.c.l.b16 %v101
    %v134 = vunpack.c.l.b16 %v102
    %v135 = vunpack.c.l.b16 %v103
    %v136 = vunpack.c.l.b16 %v104
    %v137 = vunpack.c.l.b16 %v105
    %v138 = vunpack.c.l.b16 %v106
    %v139 = vunpack.c.l.b16 %v107
    %v140 = vunpack.c.l.b16 %v108
    %v141 = vunpack.c.l.b16 %v109
    %v142 = vunpack.c.l.b16 %v110
    %v143 = vunpack.c.l.b16 %v111
    %v144 = vunpack.c.l.b16 %v112
    %v145 = vunpack.c.l.b16 %v113
    %v146 = vpack.c.b16 %v131, %v130
    %v147 = vpack.c.b16 %v133, %v132
    %v148 = vpack.c.b16 %v135, %v134
    %v149 = vpack.c.b16 %v137, %v136
    %v150 = vpack.c.b16 %v139, %v138
    %v151 = vpack.c.b16 %v141, %v140
    %v152 = vpack.c.b16 %v143, %v142
    %v153 = vpack.c.b16 %v145, %v144
    %162 = vmatprep.subr.bf16.mxu0 0
    %163 = vmatpush1.bf16.msra.mxu0 %v146
    %164 = vmatprep.subr.bf16.mxu0 0
    %165 = vmatpush1.bf16.msra.mxu0 %v147
    %166 = vmatprep.subr.bf16.mxu0 0
    %167 = vmatpush1.bf16.msra.mxu0 %v148
    %168 = vmatprep.subr.bf16.mxu0 0
    %169 = vmatpush1.bf16.msra.mxu0 %v149
    %170 = vmatprep.subr.bf16.mxu0 0
    %171 = vmatpush1.bf16.msra.mxu0 %v150
    %172 = vmatprep.subr.bf16.mxu0 0
    %173 = vmatpush1.bf16.msra.mxu0 %v151
    %174 = vmatprep.subr.bf16.mxu0 0
    %175 = vmatpush1.bf16.msra.mxu0 %v152
    %176 = vmatprep.subr.bf16.mxu0 0
    %177 = vmatpush1.bf16.msra.mxu0 %v153
    %178 = vmatprep.subr.bf16.mxu0 0
    %179 = vmatpush1.bf16.msra.mxu0 0
    %180 = vmatprep.subr.bf16.mxu0 0
    %181 = vmatpush1.bf16.msra.mxu0 0
    %182 = vmatprep.subr.bf16.mxu0 0
    %183 = vmatpush1.bf16.msra.mxu0 0
    %184 = vmatprep.subr.bf16.mxu0 0
    %185 = vmatpush1.bf16.msra.mxu0 0
    %186 = vmatprep.subr.bf16.mxu0 0
    %187 = vmatpush1.bf16.msra.mxu0 0
    %188 = vmatprep.subr.bf16.mxu0 0
    %189 = vmatpush1.bf16.msra.mxu0 0
    %190 = vmatprep.subr.bf16.mxu0 0
    %191 = vmatpush1.bf16.msra.mxu0 0
    %192 = vmatprep.subr.bf16.mxu0 0
    %193 = vmatpush1.bf16.msra.mxu0 0
    %194 = vmatprep.mubr.bf16.mxu0 0
    %195 = vmatmul.mubr.bf16.gmra.mrb[0].mxu0 %v97
    %v196 = vpop.f32.mrb[0].mxu0
    %v197 = vadd.f32 0.0, %v196
    %v198 = vpop.f32.mrb[0].mxu0
    %v199 = vpop.f32.mrb[0].mxu0
    %v200 = vpop.f32.mrb[0].mxu0
    %201 = vdwg.mxu0
    %202 = vst [vmem:[#allocation7] sm:$0xff] %v197
    // Predicated region
    $region22: #{tpu_custom_call.1} parent=1 // pred_check
      _
    $region23: #{tpu_custom_call.1} parent=1 // pred_check_branch
      %204 = sbr.rel (0) target = $region25
    $region24: #{tpu_custom_call.1} parent=1 // pred_region
      %s206 = ssub.s32 128, 128
      %207 = vsyncadd [#allocation4], %s206
      %s209 = sshll.u32 [#allocation7], 4
      %s210 = int_to_ptr.vmem [resolvable:$true] %s209
      %212 = dma.vmem_to_hbm [thread:$0]  %s210, 128, %s3, [#allocation4]
    $region25: #{tpu_custom_call.1} parent=1 // pred_fallthru
      _
    // Predicated region
    $region26: #{tpu_custom_call.1} parent=1 // pred_check
      _
    $region27: #{tpu_custom_call.1} parent=1 // pred_check_branch
      %214 = sbr.rel (0) target = $region29
    $region28: #{tpu_custom_call.1} parent=1 // pred_region
      %215 = dma.done [#allocation4], 128
    $region29: #{tpu_custom_call.1} parent=1 // pred_fallthru
      _
    %216 = vsyncpa [#allocation3], 1
    %217 = vsyncpa [#allocation6], 1
    %218 = vsyncpa [#allocation4], 1

</llo_original>
